<compile_context>
chip_gen: v7x
topology: tpu7x:2x2x1
jax: 0.10.0
libtpu: 0.0.40
codegen_flags: <defaults>
</compile_context>

<pallas_src>
import functools

import jax
import jax.numpy as jnp
import numpy as np
from jax.experimental import pallas as pl
from jax.experimental.pallas import tpu as pltpu


def _round_up(a, b):
    return ((a + b - 1) // b) * b


def _pow_static(base, gamma):
    """base ** gamma for a *static* python scalar gamma.

    Small integer exponents are unrolled into VPU multiplies (avoids the
    exp/log EUP path of a generic pow, and matches torch.pow(0., 0.) == 1
    when gamma == 0)."""
    g = float(gamma)
    if g == 0.0:
        return jnp.ones_like(base)
    gi = int(g)
    if float(gi) == g and 0 < gi <= 8:
        r = base
        for _ in range(gi - 1):
            r = r * base
        return r
    return jnp.power(base, jnp.float32(g))


def _asl_kernel(x_ref, y_ref, out_ref, *, gamma_neg, gamma_pos, clip, eps,
                hard_labels, n_rows, need_mask):
    x = x_ref[...].astype(jnp.float32)
    y = y_ref[...].astype(jnp.float32)

    xs_pos = jax.nn.sigmoid(x)
    xs_neg = 1.0 - xs_pos
    # asymmetric clipping (probability shifting on the negative side)
    if clip is not None and clip > 0:
        xs_neg = jnp.minimum(xs_neg + clip, 1.0)

    if hard_labels:
        # Binarized targets: one fused log + select instead of two logs,
        # and integer-power focal weight on the VPU.
        is_pos = y > 0.5
        p = jnp.where(is_pos, xs_pos, xs_neg)
        loss = jnp.log(jnp.maximum(p, eps))
        if gamma_neg > 0 or gamma_pos > 0:
            base = 1.0 - p
            if gamma_pos == gamma_neg:
                w = _pow_static(base, gamma_pos)
            else:
                w = jnp.where(is_pos,
                              _pow_static(base, gamma_pos),
                              _pow_static(base, gamma_neg))
            loss = loss * w
    else:
        # General (soft-target) path: exact transcription of the module.
        anti = 1.0 - y
        loss = y * jnp.log(jnp.maximum(xs_pos, eps))
        loss = loss + anti * jnp.log(jnp.maximum(xs_neg, eps))
        if gamma_neg > 0 or gamma_pos > 0:
            base = 1.0 - xs_pos * y - xs_neg * anti
            expo = gamma_pos * y + gamma_neg * anti
            loss = loss * jnp.power(base, expo)

    if need_mask:
        # Partial tail block: zero out contributions from rows past the batch.
        tile_n = x_ref.shape[0]
        row = (pl.program_id(0) * tile_n
               + jax.lax.broadcasted_iota(jnp.int32, (tile_n, 1), 0))
        loss = jnp.where(row < n_rows, loss, 0.0)

    # Per-tile, per-class partial sums: cross-sublane reduce -> (1, C), stored
    # lane-dense.  Final scalar reduction happens on a tiny array in JAX.
    out_ref[...] = jnp.sum(loss, axis=0, keepdims=True).reshape(out_ref.shape)


def _choose_tile_n(n, c, x_item, y_item, align, vmem_budget_bytes):
    # Per-row VMEM footprint: double-buffered input blocks plus a conservative
    # count of simultaneously-live f32 tile temporaries in the kernel body.
    temps = 10
    per_row = 2 * c * (x_item + y_item) + temps * c * 4
    rows = max(align, vmem_budget_bytes // max(1, per_row))
    return max(align, (rows // align) * align)


def asymmetric_loss_optimized(x, y, *, gamma_neg=0, gamma_pos=0, clip=0.05,
                              eps=1e-8, hard_labels=True, tile_n=None):
    """Pallas implementation of AsymmetricLossOptimized.forward(x, y).

    hard_labels=True assumes y is a binarized (0/1) multi-label vector (the
    module's documented contract) and enables the fused-log / integer-power
    fast path; pass hard_labels=False for soft targets."""
    assert x.ndim == 2 and x.shape == y.shape
    n, c = x.shape

    x_item = jnp.dtype(x.dtype).itemsize
    y_item = jnp.dtype(y.dtype).itemsize
    # Row alignment follows the sublane packing of the narrowest input dtype.
    align = max(8, 32 // min(x_item, y_item))

    if tile_n is None:
        tile_n = _choose_tile_n(n, c, x_item, y_item, align,
                                vmem_budget_bytes=24 * 1024 * 1024)
    else:
        tile_n = max(align, _round_up(tile_n, align))

    if tile_n >= n:
        # Single block spanning the whole batch: block dim == array dim, so no
        # alignment requirement and no masking.
        tile_n, num_tiles, need_mask = n, 1, False
    else:
        num_tiles = -(-n // tile_n)
        need_mask = (n % tile_n) != 0

    kernel = functools.partial(
        _asl_kernel,
        gamma_neg=gamma_neg, gamma_pos=gamma_pos,
        clip=clip, eps=eps, hard_labels=hard_labels,
        n_rows=n, need_mask=need_mask,
    )

    partials = pl.pallas_call(
        kernel,
        out_shape=jax.ShapeDtypeStruct((num_tiles, 1, c), jnp.float32),
        grid_spec=pltpu.PrefetchScalarGridSpec(
            num_scalar_prefetch=0,
            grid=(num_tiles,),
            in_specs=[
                pl.BlockSpec((tile_n, c), lambda i: (i, 0)),
                pl.BlockSpec((tile_n, c), lambda i: (i, 0)),
            ],
            out_specs=pl.BlockSpec((1, 1, c), lambda i: (i, 0, 0)),
        ),
        compiler_params=pltpu.CompilerParams(
            dimension_semantics=("parallel",),
            vmem_limit_bytes=32 * 1024 * 1024,
        ),
    )(x, y)

    return -jnp.sum(partials) / jnp.float32(n) / jnp.float32(c)


def _reference(x, y, *, gamma_neg=0, gamma_pos=0, clip=0.05, eps=1e-8):
    """Pure-JAX reference mirroring the PyTorch forward exactly."""
    x = x.astype(jnp.float32)
    y = y.astype(jnp.float32)
    anti = 1.0 - y
    xs_pos = jax.nn.sigmoid(x)
    xs_neg = 1.0 - xs_pos
    if clip is not None and clip > 0:
        xs_neg = jnp.minimum(xs_neg + clip, 1.0)
    loss = y * jnp.log(jnp.maximum(xs_pos, eps))
    loss = loss + anti * jnp.log(jnp.maximum(xs_neg, eps))
    if gamma_neg > 0 or gamma_pos > 0:
        w = jnp.power(1.0 - xs_pos * y - xs_neg * anti,
                      gamma_pos * y + gamma_neg * anti)
        loss = loss * w
    return -jnp.sum(loss) / x.shape[0] / y.shape[1]


if __name__ == "__main__":
    key = jax.random.PRNGKey(0)
    kx, ky = jax.random.split(key)

    N, C = 16, 128  # batch, num_classes (multi-label)
    x = jax.random.normal(kx, (N, C), dtype=jnp.float32) * 2.0
    y = jax.random.bernoulli(ky, 0.3, (N, C)).astype(jnp.float32)

    def check(out, ref):
        jax.block_until_ready(out)
        np.testing.assert_allclose(np.asarray(out), np.asarray(ref),
                                   rtol=1e-5, atol=1e-5)

    # 1) Default module config: gamma_neg=0, gamma_pos=0, clip=0.05.
    check(asymmetric_loss_optimized(x, y), _reference(x, y))

    # 2) Typical ASL config exercising the asymmetric-focusing branch.
    check(asymmetric_loss_optimized(x, y, gamma_neg=4, gamma_pos=1),
          _reference(x, y, gamma_neg=4, gamma_pos=1))

    # 3) Non-aligned batch, single full-extent block path (no padding copies).
    x13, y13 = x[:13], y[:13]
    check(asymmetric_loss_optimized(x13, y13, gamma_neg=4, gamma_pos=1),
          _reference(x13, y13, gamma_neg=4, gamma_pos=1))

    # 4) Non-aligned batch with explicit small tiles: masked partial-tail path.
    check(asymmetric_loss_optimized(x13, y13, gamma_neg=4, gamma_pos=1,
                                    tile_n=8),
          _reference(x13, y13, gamma_neg=4, gamma_pos=1))

    # 5) General soft-target path (hard_labels=False) still matches.
    check(asymmetric_loss_optimized(x, y, gamma_neg=4, gamma_pos=1,
                                    hard_labels=False),
          _reference(x, y, gamma_neg=4, gamma_pos=1))

    # 6) bf16 targets (binary labels are exact in bf16) to halve y's HBM bytes.
    check(asymmetric_loss_optimized(x, y.astype(jnp.bfloat16),
                                    gamma_neg=4, gamma_pos=1),
          _reference(x, y, gamma_neg=4, gamma_pos=1))

    print("KERNEL_OK")
</pallas_src>

<mosaic_0001>
module attributes {stable_mosaic.version = 11 : i64} {
  func.func @_asl_kernel(%arg0: i32, %arg1: memref<16x128xf32, #tpu.memory_space<vmem>>, %arg2: memref<16x128xf32, #tpu.memory_space<vmem>>, %arg3: memref<1x1x128xf32, #tpu.memory_space<vmem>>) attributes {dimension_semantics = [#tpu.dimension_semantics<parallel>], iteration_bounds = array<i64: 1>, scalar_prefetch = 0 : i64, scratch_operands = 0 : i64, tpu.core_type = #tpu.core_type<tc>, window_params = [{transform_indices = @transform_0, window_bounds = array<i64: 16, 128>}, {transform_indices = @transform_1, window_bounds = array<i64: 16, 128>}, {transform_indices = @transform_2, window_bounds = array<i64: 1, 1, 128>}]} {
    %c0 = arith.constant 0 : index
    %c0_0 = arith.constant 0 : index
    %0 = vector.load %arg1[%c0, %c0_0] : memref<16x128xf32, #tpu.memory_space<vmem>>, vector<16x128xf32>
    %c0_1 = arith.constant 0 : index
    %c0_2 = arith.constant 0 : index
    %1 = vector.load %arg2[%c0_1, %c0_2] : memref<16x128xf32, #tpu.memory_space<vmem>>, vector<16x128xf32>
    %2 = arith.negf %0 : vector<16x128xf32>
    %3 = math.exp %2 : vector<16x128xf32>
    %cst = arith.constant 1.000000e+00 : f32
    %4 = vector.broadcast %cst : f32 to vector<16x128xf32>
    %5 = arith.addf %4, %3 : vector<16x128xf32>
    %6 = arith.divf %4, %5 : vector<16x128xf32>
    %cst_3 = arith.constant 1.000000e+00 : f32
    %7 = vector.broadcast %cst_3 : f32 to vector<16x128xf32>
    %8 = arith.subf %7, %6 : vector<16x128xf32>
    %cst_4 = arith.constant 5.000000e-02 : f32
    %9 = vector.broadcast %cst_4 : f32 to vector<16x128xf32>
    %10 = arith.addf %8, %9 : vector<16x128xf32>
    %cst_5 = arith.constant 1.000000e+00 : f32
    %11 = vector.broadcast %cst_5 : f32 to vector<16x128xf32>
    %12 = arith.minimumf %10, %11 : vector<16x128xf32>
    %cst_6 = arith.constant 5.000000e-01 : f32
    %13 = vector.broadcast %cst_6 : f32 to vector<16x128xf32>
    %14 = arith.cmpf ogt, %1, %13 : vector<16x128xf32>
    %15 = arith.select %14, %6, %12 : vector<16x128xi1>, vector<16x128xf32>
    %cst_7 = arith.constant 9.99999993E-9 : f32
    %16 = vector.broadcast %cst_7 : f32 to vector<16x128xf32>
    %17 = arith.maximumf %15, %16 : vector<16x128xf32>
    %18 = math.log %17 : vector<16x128xf32>
    %cst_8 = arith.constant dense<0.000000e+00> : vector<128xf32>
    %19 = vector.multi_reduction <add>, %18, %cst_8 [0] : vector<16x128xf32> to vector<128xf32>
    %20 = vector.shape_cast %19 : vector<128xf32> to vector<1x128xf32>
    %21 = vector.shape_cast %20 : vector<1x128xf32> to vector<1x1x128xf32>
    %c0_9 = arith.constant 0 : index
    %c0_10 = arith.constant 0 : index
    %c0_11 = arith.constant 0 : index
    %22 = vector.load %arg3[%c0_9, %c0_10, %c0_11] : memref<1x1x128xf32, #tpu.memory_space<vmem>>, vector<1x1x128xf32>
    tpu.vector_store %arg3[%c0_9, %c0_10, %c0_11], %21 {strides = array<i32>} : memref<1x1x128xf32, #tpu.memory_space<vmem>>, vector<1x1x128xf32>,
    return
  }
  func.func @transform_0(%arg0: i32) -> (i32, i32) {
    %c0_i32 = arith.constant 0 : i32
    %c0_i32_0 = arith.constant 0 : i32
    return %arg0, %c0_i32 : i32, i32
  }
  func.func @transform_1(%arg0: i32) -> (i32, i32) {
    %c0_i32 = arith.constant 0 : i32
    %c0_i32_0 = arith.constant 0 : i32
    return %arg0, %c0_i32 : i32, i32
  }
  func.func @transform_2(%arg0: i32) -> (i32, i32, i32) {
    %c0_i32 = arith.constant 0 : i32
    %c0_i32_0 = arith.constant 0 : i32
    %c0_i32_1 = arith.constant 0 : i32
    return %arg0, %c0_i32, %c0_i32_0 : i32, i32, i32
  }
}

</mosaic_0001>

<llo_original>
// kernel: tpu_custom_call.1
$region0: #{tpu_custom_call.1}
  #allocation0 [shape = 'u32[]', space=smem, size = 0x4, offset = 0x4, fixed_abs, tag = 'smem constant byte address 0x4 - core index']
  #allocation1 [shape = 'u32[144,128]{1,0:T(1,128)}', space=vmem, size = 0x12000, scoped, tag = 'internal scratch']
  %s0 = inlined_call_operand.hbm [shape: f32[16,128], index: 0, kind: input, shape index: {}]
  %s1 = inlined_call_operand.hbm [shape: f32[16,128], index: 1, kind: input, shape index: {}]
  %s2 = inlined_call_operand.hbm [shape: f32[1,1,128], index: 2, kind: output, shape index: {}]
  %s3 = sld [smem:[#allocation0]]
  $region26: #{tpu_custom_call.1} parent=0
    _
  %s5 = ssub.s32 1, %s3
  %s6 = scalar_select 0, %s5, %s3
  $region1: #{tpu_custom_call.1} parent=0
    #allocation2 [shape = 'u8[8192]{0}', space=vmem, size = 0x2000, scoped, tag = 'input window, operand 0, single buffered']
    #allocation3 [shape = 's32[1]{0}', space=sflag, size = 0x4, scoped, tag = 'scoped memory for tpu_custom_call.1']
    #allocation4 [shape = 's32[1]{0}', space=sflag, size = 0x4, scoped, tag = 'scoped memory for tpu_custom_call.1']
    #allocation5 [shape = 'u8[8192]{0}', space=vmem, size = 0x2000, scoped, tag = 'input window, operand 1, single buffered']
    #allocation6 [shape = 's32[1]{0}', space=sflag, size = 0x4, scoped, tag = 'scoped memory for tpu_custom_call.1']
    #allocation7 [shape = 'u8[512]{0}', space=vmem, size = 0x400, scoped, tag = 'output window, operand 0, single buffered']
    %7 = vsyncpa [#allocation3], 0
    %8 = vsyncpa [#allocation6], 0
    %9 = vsyncpa [#allocation4], 0
    // Predicated region
    $region2: #{tpu_custom_call.1} parent=1 // pred_check
      _
    $region3: #{tpu_custom_call.1} parent=1 // pred_check_branch
      %11 = sbr.rel (0) target = $region5
    $region4: #{tpu_custom_call.1} parent=1 // pred_region
      %s13 = ssub.s32 256, 256
      %14 = vsyncadd [#allocation3], %s13
      %s15 = sshll.u32 [#allocation2], 4
      %s16 = int_to_ptr.vmem [resolvable:$true] %s15
      %21 = dma.hbm_to_vmem [thread:$0]  %s0, 256, %s16, [#allocation3], 128, 128, 8
    $region5: #{tpu_custom_call.1} parent=1 // pred_fallthru
      _
    // Predicated region
    $region6: #{tpu_custom_call.1} parent=1 // pred_check
      _
    $region7: #{tpu_custom_call.1} parent=1 // pred_check_branch
      %23 = sbr.rel (0) target = $region9
    $region8: #{tpu_custom_call.1} parent=1 // pred_region
      %s25 = ssub.s32 256, 256
      %26 = vsyncadd [#allocation6], %s25
      %s27 = sshll.u32 [#allocation5], 4
      %s28 = int_to_ptr.vmem [resolvable:$true] %s27
      %33 = dma.hbm_to_vmem [thread:$0]  %s1, 256, %s28, [#allocation6], 128, 128, 8
    $region9: #{tpu_custom_call.1} parent=1 // pred_fallthru
      _
    // Predicated region
    $region10: #{tpu_custom_call.1} parent=1 // pred_check
      _
    $region11: #{tpu_custom_call.1} parent=1 // pred_check_branch
      %35 = sbr.rel (0) target = $region13
    $region12: #{tpu_custom_call.1} parent=1 // pred_region
      %36 = dma.done [#allocation3], 256
    $region13: #{tpu_custom_call.1} parent=1 // pred_fallthru
      _
    // Predicated region
    $region14: #{tpu_custom_call.1} parent=1 // pred_check
      _
    $region15: #{tpu_custom_call.1} parent=1 // pred_check_branch
      %38 = sbr.rel (0) target = $region17
    $region16: #{tpu_custom_call.1} parent=1 // pred_region
      %39 = dma.done [#allocation6], 256
    $region17: #{tpu_custom_call.1} parent=1 // pred_fallthru
      _
    %v40 = vld [vmem:[#allocation2] sm:$0xff]
    %v41 = vld [vmem:[#allocation2 + $0x8] sm:$0xff]
    %v42 = vld [vmem:[#allocation5] sm:$0xff]
    %v43 = vld [vmem:[#allocation5 + $0x8] sm:$0xff]
    %v44 = vxor.u32 %v40, 2147483648
    %v45 = vxor.u32 %v41, 2147483648
    %v46 = vmul.f32 %v44, 1.442695
    %v47 = vpow.pop %v46
    %v48 = vmul.f32 %v45, 1.442695
    %v49 = vpow.pop %v48
    %v50 = vadd.f32 %v47, 1.0
    %v51 = vadd.f32 %v49, 1.0
    %v52 = vrcp.pop %v50
    %v53 = vmul.f32 1.0, %v52
    %v54 = vrcp.pop %v51
    %v55 = vmul.f32 1.0, %v54
    %v56 = vsub.f32 1.0, %v53
    %v57 = vsub.f32 1.0, %v55
    %v58 = vadd.f32 %v56, 0.05
    %v59 = vadd.f32 %v57, 0.05
    %v60 = vmin.f32 %v58, 1.0
    %v61 = vmin.f32 %v59, 1.0
    %vm62 = vcmp.gt.f32.partialorder %v42, 0.5
    %vm63 = vcmp.gt.f32.partialorder %v43, 0.5
    %v64 = vsel %vm62, %v53, %v60
    %v65 = vsel %vm63, %v55, %v61
    %v66 = vmax.f32 %v64, 1e-08
    %v67 = vmax.f32 %v65, 1e-08
    %v68 = vlog2.pop %v66
    %v69 = vmul.f32 %v68, 0.6931472
    %v70 = vlog2.pop %v67
    %v71 = vmul.f32 %v70, 0.6931472
    %v72 = vadd.f32 %v69, %v71
    %v73 = vrot.slane %v72, 4
    %v74 = vadd.f32 %v72, %v73
    %v75 = vrot.slane %v74, 2
    %v76 = vadd.f32 %v74, %v75
    %v77 = vrot.slane %v76, 1
    %v78 = vadd.f32 %v76, %v77
    %79 = vst [vmem:[#allocation7] sm:$0x1] %v78
    // Predicated region
    $region18: #{tpu_custom_call.1} parent=1 // pred_check
      _
    $region19: #{tpu_custom_call.1} parent=1 // pred_check_branch
      %81 = sbr.rel (0) target = $region21
    $region20: #{tpu_custom_call.1} parent=1 // pred_region
      %s83 = ssub.s32 16, 16
      %84 = vsyncadd [#allocation4], %s83
      %s86 = sshll.u32 [#allocation7], 4
      %s87 = int_to_ptr.vmem [resolvable:$true] %s86
      %89 = dma.vmem_to_hbm [thread:$0]  %s87, 16, %s2, [#allocation4]
    $region21: #{tpu_custom_call.1} parent=1 // pred_fallthru
      _
    // Predicated region
    $region22: #{tpu_custom_call.1} parent=1 // pred_check
      _
    $region23: #{tpu_custom_call.1} parent=1 // pred_check_branch
      %91 = sbr.rel (0) target = $region25
    $region24: #{tpu_custom_call.1} parent=1 // pred_region
      %92 = dma.done [#allocation4], 16
    $region25: #{tpu_custom_call.1} parent=1 // pred_fallthru
      _
    %93 = vsyncpa [#allocation3], 1
    %94 = vsyncpa [#allocation6], 1
    %95 = vsyncpa [#allocation4], 1

</llo_original>
